<compile_context>
chip_gen: v7x
topology: tpu7x:2x2x1
jax: 0.10.0
libtpu: 0.0.40
codegen_flags: <defaults>
</compile_context>

<pallas_src>
import jax
import jax.numpy as jnp
from jax import lax
from jax.experimental import pallas as pl
from jax.experimental.pallas import tpu as pltpu

_SUBLANES = 8
_LANES = 128


def _round_up(v, m):
    return ((v + m - 1) // m) * m


def _vmem_limit_bytes():
    """Explicit scoped-VMEM limit (defaults are 16/32 MiB, far below physical)."""
    kind = ""
    try:
        kind = jax.devices()[0].device_kind.lower()
    except Exception:
        pass
    if "v5" in kind or "v6" in kind:      # 128 MiB physical VMEM per core
        return 96 * 1024 * 1024
    return 48 * 1024 * 1024               # v7x: 64 MiB physical -> stay well under


def _choose_tn(n):
    """Column tile: full N unless N is a large multiple of 128, in which case
    pick an exact divisor <= 512 so there is never any column raggedness."""
    if n % _LANES != 0 or n <= 512:
        return n
    for tn in (512, 384, 256, 128):
        if n % tn == 0:
            return tn
    return n


def _choose_tm(batch, d, tn, w_bytes_el, budget):
    """Rows per batch tile so double-buffered blocks + weight/bias tiles fit
    in `budget` bytes of VMEM (leaves headroom for compiler temporaries)."""
    row_bytes = 4 * (d + tn)                       # x block + out/y block, f32
    fixed = 2 * (d * tn * w_bytes_el + 4 * tn)     # weight + bias (x2 conservative)
    avail = max(budget - fixed, 2 * row_bytes * _SUBLANES)
    tm = int(avail // (2 * row_bytes))             # x2: double buffering
    tm = max(_SUBLANES, min(512, tm))
    tm -= tm % _SUBLANES
    return min(tm, _round_up(batch, _SUBLANES))


def _make_infer_kernel(cast_x_bf16):
    def kernel(x_ref, w_ref, b_ref, o_ref):
        x = x_ref[...]
        if cast_x_bf16:
            x = x.astype(jnp.bfloat16)
        z = jnp.dot(x, w_ref[...], preferred_element_type=jnp.float32) + b_ref[...]
        o_ref[...] = jax.nn.sigmoid(z).astype(o_ref.dtype)

    return kernel


def _make_train_kernel(tm, batch, cast_x_bf16, need_row_mask):
    def kernel(x_ref, w_ref, b_ref, y_ref, sse_ref):
        x = x_ref[...]
        if cast_x_bf16:
            x = x.astype(jnp.bfloat16)
        z = jnp.dot(x, w_ref[...], preferred_element_type=jnp.float32) + b_ref[...]
        d = jax.nn.sigmoid(z) - y_ref[...]
        if need_row_mask:
            # Mask overhang rows of the ragged last batch block BEFORE
            # squaring: the bounded DMA leaves unspecified data there and the
            # where-select discards any NaN/Inf it produced.
            rows = pl.program_id(0) * tm + lax.broadcasted_iota(jnp.int32, d.shape, 0)
            d = jnp.where(rows < batch, d, 0.0)
        sse_ref[0, 0] = jnp.sum(d * d)   # per-block partial SSE

    return kernel


def met_model_forward(x, w, b, y=None, *, bf16_matmul=None):
    """Pallas equivalent of MetModel.forward.

    x: [B, D] float32
    w: [D, N] float32  (transposed nn.Linear weight)
    b: [N]    float32
    y: optional [B, N] float32 targets; if given returns the scalar MSE loss
       of sigmoid(x @ w + b) vs y, otherwise returns sigmoid(x @ w + b).
    bf16_matmul: None -> auto (enabled when D >= 256); True/False to force.
       Only MXU inputs go bf16 (looser numerics, ~1e-3); bias/sigmoid/loss
       stay f32 so the path is also safe on v5e (no bf16 VPU/EUP).
    """
    B, D = x.shape
    Dw, N = w.shape
    assert Dw == D, "weight must be [D, N]"

    if bf16_matmul is None:
        bf16_matmul = D >= 256   # MXU only becomes the binding unit at larger D

    x = x.astype(jnp.float32)
    bias2d = b.astype(jnp.float32).reshape(1, N)
    # In a real model the weight would be stored as bf16 at init; the cast here
    # stands in for that (halves weight DMA bytes and VMEM residency).
    w = w.astype(jnp.bfloat16 if bf16_matmul else jnp.float32)

    vmem_limit = _vmem_limit_bytes()
    budget = (vmem_limit * 3) // 4
    tn = _choose_tn(N)
    tm = _choose_tm(B, D, tn, 2 if bf16_matmul else 4, budget)
    # TODO(synk): for very large D (or huge non-128-multiple N) add a reduction
    # grid axis over D with a VMEM accumulator instead of a full-D x block.
    grid = (pl.cdiv(B, tm), N // tn)   # (batch tiles, column tiles)

    x_spec = pl.BlockSpec((tm, D), lambda i, j: (i, 0))
    w_spec = pl.BlockSpec((D, tn), lambda i, j: (0, j))
    b_spec = pl.BlockSpec((1, tn), lambda i, j: (0, j))
    yo_spec = pl.BlockSpec((tm, tn), lambda i, j: (i, j))

    params = pltpu.CompilerParams(
        dimension_semantics=("parallel", "parallel"),   # megacore-shardable
        vmem_limit_bytes=vmem_limit,
    )

    if y is None:
        return pl.pallas_call(
            _make_infer_kernel(bf16_matmul),
            grid=grid,
            in_specs=[x_spec, w_spec, b_spec],
            out_specs=yo_spec,
            out_shape=jax.ShapeDtypeStruct((B, N), jnp.float32),
            compiler_params=params,
        )(x, w, bias2d)

    # Training path: fused linear + sigmoid + squared error.  Each grid block
    # writes its own partial SSE to SMEM; final tiny reduce + 1/(B*N) in the
    # wrapper keeps every block independent (no serial accumulator).
    y = y.astype(jnp.float32)
    kernel = _make_train_kernel(tm, B, bf16_matmul, B % tm != 0)
    partial_sse = pl.pallas_call(
        kernel,
        grid=grid,
        in_specs=[x_spec, w_spec, b_spec, yo_spec],
        out_specs=pl.BlockSpec((1, 1), lambda i, j: (i, j),
                               memory_space=pltpu.SMEM),
        out_shape=jax.ShapeDtypeStruct(grid, jnp.float32),
        compiler_params=params,
    )(x, w, bias2d, y)
    return jnp.sum(partial_sse) * (1.0 / float(B * N))


if __name__ == "__main__":
    # Small shapes consistent with the module: batch=8, input_size=32, num_size=16
    B, D, N = 8, 32, 16
    key = jax.random.PRNGKey(0)
    kx, kw, kb, ky = jax.random.split(key, 4)

    x = jax.random.normal(kx, (B, D), dtype=jnp.float32)
    bound = 1.0 / (D ** 0.5)
    w = jax.random.uniform(kw, (D, N), minval=-bound, maxval=bound,
                           dtype=jnp.float32)
    bias = jax.random.uniform(kb, (N,), minval=-bound, maxval=bound,
                              dtype=jnp.float32)
    y = jax.random.uniform(ky, (B, N), dtype=jnp.float32)

    # One jit boundary so the (tiny) glue ops fuse with the custom call.
    fwd = jax.jit(met_model_forward, static_argnames=("bf16_matmul",))

    # Inference path: y_pred = sigmoid(x @ W + b)
    y_pred = fwd(x, w, bias)
    jax.block_until_ready(y_pred)

    # Training path: scalar MSE loss (single fused kernel + tiny wrapper sum)
    loss = fwd(x, w, bias, y)
    jax.block_until_ready(loss)

    # Reference check in plain JAX
    ref_pred = jax.nn.sigmoid(x @ w + bias)
    ref_loss = jnp.mean((ref_pred - y) ** 2)
    assert y_pred.shape == (B, N)
    assert jnp.allclose(y_pred, ref_pred, atol=1e-5), "y_pred mismatch"
    assert jnp.allclose(loss, ref_loss, atol=1e-5), "loss mismatch"

    print("KERNEL_OK")
</pallas_src>

<mosaic_0001>
module attributes {stable_mosaic.version = 11 : i64} {
  func.func @kernel(%arg0: i32, %arg1: i32, %arg2: memref<8x32xf32, #tpu.memory_space<vmem>>, %arg3: memref<32x16xf32, #tpu.memory_space<vmem>>, %arg4: memref<1x16xf32, #tpu.memory_space<vmem>>, %arg5: memref<8x16xf32, #tpu.memory_space<vmem>>) attributes {dimension_semantics = [#tpu.dimension_semantics<parallel>, #tpu.dimension_semantics<parallel>], iteration_bounds = array<i64: 1, 1>, scalar_prefetch = 0 : i64, scratch_operands = 0 : i64, tpu.core_type = #tpu.core_type<tc>, window_params = [{transform_indices = @transform_0, window_bounds = array<i64: 8, 32>}, {transform_indices = @transform_1, window_bounds = array<i64: 32, 16>}, {transform_indices = @transform_2, window_bounds = array<i64: 1, 16>}, {transform_indices = @transform_3, window_bounds = array<i64: 8, 16>}]} {
    %c0 = arith.constant 0 : index
    %c0_0 = arith.constant 0 : index
    %0 = vector.load %arg2[%c0, %c0_0] : memref<8x32xf32, #tpu.memory_space<vmem>>, vector<8x32xf32>
    %c0_1 = arith.constant 0 : index
    %c0_2 = arith.constant 0 : index
    %1 = vector.load %arg3[%c0_1, %c0_2] : memref<32x16xf32, #tpu.memory_space<vmem>>, vector<32x16xf32>
    %cst = arith.constant dense<0.000000e+00> : vector<8x16xf32>
    %2 = tpu.matmul %0, %1, %cst {dimension_numbers = #tpu.dot_dimension_numbers<[1], [0], [0], [1], [0, 0, 1, 1], [], []>} : vector<8x32xf32>, vector<32x16xf32>, vector<8x16xf32> -> vector<8x16xf32>
    %c0_3 = arith.constant 0 : index
    %c0_4 = arith.constant 0 : index
    %3 = vector.load %arg4[%c0_3, %c0_4] : memref<1x16xf32, #tpu.memory_space<vmem>>, vector<1x16xf32>
    %4 = vector.broadcast %3 : vector<1x16xf32> to vector<8x16xf32>
    %5 = arith.addf %2, %4 : vector<8x16xf32>
    %6 = arith.negf %5 : vector<8x16xf32>
    %7 = math.exp %6 : vector<8x16xf32>
    %cst_5 = arith.constant 1.000000e+00 : f32
    %8 = vector.broadcast %cst_5 : f32 to vector<8x16xf32>
    %9 = arith.addf %8, %7 : vector<8x16xf32>
    %10 = arith.divf %8, %9 : vector<8x16xf32>
    %c0_6 = arith.constant 0 : index
    %c0_7 = arith.constant 0 : index
    %11 = vector.load %arg5[%c0_6, %c0_7] : memref<8x16xf32, #tpu.memory_space<vmem>>, vector<8x16xf32>
    tpu.vector_store %arg5[%c0_6, %c0_7], %10 {strides = array<i32>} : memref<8x16xf32, #tpu.memory_space<vmem>>, vector<8x16xf32>,
    return
  }
  func.func @transform_0(%arg0: i32, %arg1: i32) -> (i32, i32) {
    %c0_i32 = arith.constant 0 : i32
    %c0_i32_0 = arith.constant 0 : i32
    return %arg0, %c0_i32 : i32, i32
  }
  func.func @transform_1(%arg0: i32, %arg1: i32) -> (i32, i32) {
    %c0_i32 = arith.constant 0 : i32
    %c0_i32_0 = arith.constant 0 : i32
    return %c0_i32, %arg1 : i32, i32
  }
  func.func @transform_2(%arg0: i32, %arg1: i32) -> (i32, i32) {
    %c0_i32 = arith.constant 0 : i32
    %c0_i32_0 = arith.constant 0 : i32
    return %c0_i32, %arg1 : i32, i32
  }
  func.func @transform_3(%arg0: i32, %arg1: i32) -> (i32, i32) {
    %c0_i32 = arith.constant 0 : i32
    return %arg0, %arg1 : i32, i32
  }
}

</mosaic_0001>

<llo_original>
// kernel: met_model_forward.1
$region0: #{met_model_forward.1}
  #allocation0 [shape = 'u32[]', space=smem, size = 0x4, offset = 0x4, fixed_abs, tag = 'smem constant byte address 0x4 - core index']
  #allocation1 [shape = 'u32[144,128]{1,0:T(1,128)}', space=vmem, size = 0x12000, scoped, tag = 'internal scratch']
  %s0 = inlined_call_operand.vmem [shape: f32[8,32], index: 0, kind: input, shape index: {}]
  %s1 = inlined_call_operand.vmem [shape: f32[32,16], index: 1, kind: input, shape index: {}]
  %s2 = inlined_call_operand.vmem [shape: f32[1,16], index: 2, kind: input, shape index: {}]
  %s3 = inlined_call_operand.hbm [shape: f32[8,16], index: 3, kind: output, shape index: {}]
  %s4 = sld [smem:[#allocation0]]
  $region22: #{met_model_forward.1} parent=0
    _
  %s6 = ssub.s32 1, %s4
  %s7 = scalar_select 0, %s6, %s4
  $region1: #{met_model_forward.1} parent=0
    #allocation2 [shape = 'u8[4096]{0}', space=vmem, size = 0x1000, scoped, tag = 'output window, operand 0, single buffered']
    #allocation3 [shape = 's32[1]{0}', space=sflag, size = 0x4, scoped, tag = 'scoped memory for met_model_forward.1']
    %8 = vsyncpa [#allocation3], 0
    // Predicated region
    $region2: #{met_model_forward.1} parent=1 // pred_check
      _
    $region3: #{met_model_forward.1} parent=1 // pred_check_branch
      %10 = sbr.rel (0) target = $region5
    $region4: #{met_model_forward.1} parent=1 // pred_region
      _
    $region5: #{met_model_forward.1} parent=1 // pred_fallthru
      _
    // Predicated region
    $region6: #{met_model_forward.1} parent=1 // pred_check
      _
    $region7: #{met_model_forward.1} parent=1 // pred_check_branch
      %12 = sbr.rel (0) target = $region9
    $region8: #{met_model_forward.1} parent=1 // pred_region
      _
    $region9: #{met_model_forward.1} parent=1 // pred_fallthru
      _
    // Predicated region
    $region10: #{met_model_forward.1} parent=1 // pred_check
      _
    $region11: #{met_model_forward.1} parent=1 // pred_check_branch
      %14 = sbr.rel (0) target = $region13
    $region12: #{met_model_forward.1} parent=1 // pred_region
      _
    $region13: #{met_model_forward.1} parent=1 // pred_fallthru
      _
    %v15 = vld [vmem:[%s0] sm:$0xff]
    %v16 = vld [vmem:[%s1] sm:$0xff]
    %v17 = vld [vmem:[%s1 + $0x8] sm:$0xff]
    %v18 = vld [vmem:[%s1 + $0x10] sm:$0xff]
    %v19 = vld [vmem:[%s1 + $0x18] sm:$0xff]
    %v20 = vld [vmem:[%s2] sm:$0x1]
    %v22 = vlaneseq
    %v23 = vshrl.u32 %v22, 7
    %v24 = vsub.s32 0, %v23
    %v25 = vrot.slane %v20, %v24
    %vm27 = vcmask 261120
    %v29 = vsel %vm27, %v15, 0
    %31 = vmatprep.subr.mxu0 0.0
    %32 = vmatpush1.msra.mxu0 %v16
    %33 = vmatprep.subr.mxu0 0.0
    %34 = vmatpush1.msra.mxu0 %v17
    %35 = vmatprep.subr.mxu0 0.0
    %36 = vmatpush1.msra.mxu0 %v18
    %37 = vmatprep.subr.mxu0 0.0
    %38 = vmatpush1.msra.mxu0 %v19
    %39 = vmatprep.subr.mxu0 0.0
    %40 = vmatpush1.msra.mxu0 0.0
    %41 = vmatprep.subr.mxu0 0.0
    %42 = vmatpush1.msra.mxu0 0.0
    %43 = vmatprep.subr.mxu0 0.0
    %44 = vmatpush1.msra.mxu0 0.0
    %45 = vmatprep.subr.mxu0 0.0
    %46 = vmatpush1.msra.mxu0 0.0
    %47 = vmatprep.subr.mxu0 0.0
    %48 = vmatpush1.msra.mxu0 0.0
    %49 = vmatprep.subr.mxu0 0.0
    %50 = vmatpush1.msra.mxu0 0.0
    %51 = vmatprep.subr.mxu0 0.0
    %52 = vmatpush1.msra.mxu0 0.0
    %53 = vmatprep.subr.mxu0 0.0
    %54 = vmatpush1.msra.mxu0 0.0
    %55 = vmatprep.subr.mxu0 0.0
    %56 = vmatpush1.msra.mxu0 0.0
    %57 = vmatprep.subr.mxu0 0.0
    %58 = vmatpush1.msra.mxu0 0.0
    %59 = vmatprep.subr.mxu0 0.0
    %60 = vmatpush1.msra.mxu0 0.0
    %61 = vmatprep.subr.mxu0 0.0
    %62 = vmatpush1.msra.mxu0 0.0
    %63 = vmatprep.subr.mxu0 0.0
    %64 = vmatpush1.msra.mxu0 0.0
    %65 = vmatprep.subr.mxu0 0.0
    %66 = vmatpush1.msra.mxu0 0.0
    %67 = vmatprep.subr.mxu0 0.0
    %68 = vmatpush1.msra.mxu0 0.0
    %69 = vmatprep.subr.mxu0 0.0
    %70 = vmatpush1.msra.mxu0 0.0
    %71 = vmatprep.subr.mxu0 0.0
    %72 = vmatpush1.msra.mxu0 0.0
    %73 = vmatprep.subr.mxu0 0.0
    %74 = vmatpush1.msra.mxu0 0.0
    %75 = vmatprep.subr.mxu0 0.0
    %76 = vmatpush1.msra.mxu0 0.0
    %77 = vmatprep.subr.mxu0 0.0
    %78 = vmatpush1.msra.mxu0 0.0
    %79 = vmatprep.subr.mxu0 0.0
    %80 = vmatpush1.msra.mxu0 0.0
    %81 = vmatprep.subr.mxu0 0.0
    %82 = vmatpush1.msra.mxu0 0.0
    %83 = vmatprep.subr.mxu0 0.0
    %84 = vmatpush1.msra.mxu0 0.0
    %85 = vmatprep.subr.mxu0 0.0
    %86 = vmatpush1.msra.mxu0 0.0
    %87 = vmatprep.subr.mxu0 0.0
    %88 = vmatpush1.msra.mxu0 0.0
    %89 = vmatprep.subr.mxu0 0.0
    %90 = vmatpush1.msra.mxu0 0.0
    %91 = vmatprep.subr.mxu0 0.0
    %92 = vmatpush1.msra.mxu0 0.0
    %93 = vmatprep.subr.mxu0 0.0
    %94 = vmatpush1.msra.mxu0 0.0
    %95 = vmatprep.mubr.f32.mxu0 0.0
    %96 = vmatmul.mubr.f32.gmra.mrb[0].mxu0 %v29
    %v97 = vpop.f32.mrb[0].mxu0
    %v98 = vadd.f32 %v25, %v97
    %v99 = vpop.f32.mrb[0].mxu0
    %100 = vdwg.mxu0
    %v101 = vxor.u32 %v98, 2147483648
    %v102 = vmul.f32 %v101, 1.442695
    %v103 = vpow.pop %v102
    %v104 = vadd.f32 %v103, 1.0
    %v105 = vrcp.pop %v104
    %v106 = vmul.f32 1.0, %v105
    %vm107 = vcmask 130048
    %108 = vst.msk [vmem:[#allocation2] sm:$0xff] %vm107, %v106
    // Predicated region
    $region14: #{met_model_forward.1} parent=1 // pred_check
      _
    $region15: #{met_model_forward.1} parent=1 // pred_check_branch
      %110 = sbr.rel (0) target = $region17
    $region16: #{met_model_forward.1} parent=1 // pred_region
      %s112 = ssub.s32 128, 128
      %113 = vsyncadd [#allocation3], %s112
      %s115 = sshll.u32 [#allocation2], 4
      %s116 = int_to_ptr.vmem [resolvable:$true] %s115
      %118 = dma.vmem_to_hbm [thread:$0]  %s116, 128, %s3, [#allocation3]
    $region17: #{met_model_forward.1} parent=1 // pred_fallthru
      _
    // Predicated region
    $region18: #{met_model_forward.1} parent=1 // pred_check
      _
    $region19: #{met_model_forward.1} parent=1 // pred_check_branch
      %120 = sbr.rel (0) target = $region21
    $region20: #{met_model_forward.1} parent=1 // pred_region
      %121 = dma.done [#allocation3], 128
    $region21: #{met_model_forward.1} parent=1 // pred_fallthru
      _
    %122 = vsyncpa [#allocation3], 1

</llo_original>
